<compile_context>
chip_gen: v6e
topology: v6e:2x2x1
jax: 0.10.0
libtpu: 0.0.40
codegen_flags: <defaults>
</compile_context>

<pallas_src>
import jax
import jax.numpy as jnp
import numpy as np
from jax.experimental import pallas as pl
from jax.experimental.pallas import tpu as pltpu


def _round_up(x, m):
    return ((x + m - 1) // m) * m


def _vmem_budget_bytes():
    """Per-generation VMEM budget (bytes) with headroom for compiler scratch."""
    cap = 64 * 1024 * 1024  # safe fallback: v7x physical VMEM
    try:
        cap = int(pltpu.get_tpu_info().vmem_capacity_bytes)
    except Exception:
        pass
    # ~80% of physical, capped: ~51 MiB on v7x (64 MiB), ~102 MiB on v5e/v6e (128 MiB).
    return min(int(cap * 0.8), 112 * 1024 * 1024)


def _vmem_cost(tm, tf, D, dff, n_f_tiles, x_bytes, w_bytes, out_bytes):
    """Rough VMEM footprint with 2x double-buffering on every pipelined input."""
    w = 2 * (D * tf + tf * D) * w_bytes          # W1 column tile + W2 row tile
    x = 2 * tm * D * x_bytes                     # x rows
    o = 2 * tm * D * out_bytes                   # out rows
    h = tm * tf * 4                              # f32 hidden activation (in-kernel temp)
    acc = tm * D * 4 if n_f_tiles > 1 else 0     # f32 accumulator scratch
    bias = 2 * (tf + D) * 4
    return w + x + o + h + acc + bias


def _pick_tf(tm, D, dff, x_bytes, w_bytes, out_bytes, budget):
    """Full d_ff residency if it fits; otherwise the largest 128-aligned divisor that fits."""
    if _vmem_cost(tm, dff, D, dff, 1, x_bytes, w_bytes, out_bytes) <= budget:
        return dff
    if dff % 128 != 0:
        return dff                               # can't lane-align-tile an unaligned d_ff
    t = dff - 128
    while t >= 128:
        if dff % t == 0 and _vmem_cost(tm, t, D, dff, dff // t,
                                       x_bytes, w_bytes, out_bytes) <= budget:
            return t
        t -= 128
    return 128


def _ffn_kernel_resident(x_ref, w1_ref, b1_ref, w2_ref, b2_ref, o_ref):
    # Whole W1/W2 resident in VMEM: single pass, no accumulator.
    h = jnp.dot(x_ref[...], w1_ref[...], preferred_element_type=jnp.float32)
    h = jnp.maximum(h + b1_ref[...], 0.0)        # bias + ReLU in f32
    # TODO(synk): nn.Dropout is the identity in eval/inference mode; training-mode
    # dropout would need pltpu.prng_seed / prng_random_bits.
    out = jnp.dot(h.astype(w2_ref.dtype), w2_ref[...],
                  preferred_element_type=jnp.float32)
    o_ref[...] = (out + b2_ref[...]).astype(o_ref.dtype)


def _ffn_kernel_tiled(x_ref, w1_ref, b1_ref, w2_ref, b2_ref, o_ref, acc_ref):
    # d_ff does not fit VMEM: reduce over d_ff tiles (last grid axis, "arbitrary").
    f = pl.program_id(1)

    @pl.when(f == 0)
    def _():
        acc_ref[...] = jnp.zeros_like(acc_ref)

    h = jnp.dot(x_ref[...], w1_ref[...], preferred_element_type=jnp.float32)
    h = jnp.maximum(h + b1_ref[...], 0.0)
    acc_ref[...] += jnp.dot(h.astype(w2_ref.dtype), w2_ref[...],
                            preferred_element_type=jnp.float32)

    @pl.when(f == pl.num_programs(1) - 1)
    def _():
        o_ref[...] = (acc_ref[...] + b2_ref[...]).astype(o_ref.dtype)


def positionwise_ffn(x, w1, b1, w2, b2, *, use_bf16=True, block_m=256, block_f=None):
    """y = relu(x @ w1 + b1) @ w2 + b2   (w1/w2 are the torch weights transposed)."""
    orig_shape = x.shape
    out_dtype = x.dtype
    D = orig_shape[-1]
    dff = w1.shape[1]
    x2d = x.reshape(-1, D)
    M = x2d.shape[0]

    compute_dtype = jnp.bfloat16 if use_bf16 else x2d.dtype
    x2d = x2d.astype(compute_dtype)
    w1c = w1.astype(compute_dtype)
    w2c = w2.astype(compute_dtype)
    b1c = b1.reshape(1, dff).astype(jnp.float32)
    b2c = b2.reshape(1, D).astype(jnp.float32)

    x_bytes = jnp.dtype(compute_dtype).itemsize
    w_bytes = x_bytes
    out_bytes = jnp.dtype(out_dtype).itemsize

    # --- row tile: pad M (never fall back to tm = M); >=2 tiles for v7x's dual TCs ---
    tm = min(block_m, _round_up(M, 8))
    tm = max(8, (tm // 8) * 8)
    m_pad = _round_up(M, tm)
    if m_pad // tm < 2 and M > 8:
        tm = _round_up((M + 1) // 2, 8)
        m_pad = _round_up(M, tm)
    if m_pad != M:
        x2d = jnp.pad(x2d, ((0, m_pad - M), (0, 0)))

    # --- d_ff tile: fully resident weights if they fit the VMEM budget ---
    budget = _vmem_budget_bytes()
    if block_f is None:
        tf = _pick_tf(tm, D, dff, x_bytes, w_bytes, out_bytes, budget)
    else:
        ok = (dff % block_f == 0) and (block_f % 128 == 0 or block_f == dff)
        tf = block_f if ok else dff

    cost = pl.CostEstimate(
        flops=4 * m_pad * D * dff,
        transcendentals=0,
        bytes_accessed=m_pad * D * (x_bytes + out_bytes) + 2 * D * dff * w_bytes + 4 * (dff + D),
    )

    if tf == dff:
        grid_spec = pltpu.PrefetchScalarGridSpec(
            num_scalar_prefetch=0,
            grid=(m_pad // tm,),
            in_specs=[
                pl.BlockSpec((tm, D), lambda i: (i, 0)),     # x rows
                pl.BlockSpec((D, dff), lambda i: (0, 0)),    # W1 (resident)
                pl.BlockSpec((1, dff), lambda i: (0, 0)),    # b1 (resident)
                pl.BlockSpec((dff, D), lambda i: (0, 0)),    # W2 (resident)
                pl.BlockSpec((1, D), lambda i: (0, 0)),      # b2 (resident)
            ],
            out_specs=pl.BlockSpec((tm, D), lambda i: (i, 0)),
        )
        kernel = _ffn_kernel_resident
        semantics = ("parallel",)
    else:
        grid_spec = pltpu.PrefetchScalarGridSpec(
            num_scalar_prefetch=0,
            grid=(m_pad // tm, dff // tf),
            in_specs=[
                pl.BlockSpec((tm, D), lambda i, f: (i, 0)),  # x rows
                pl.BlockSpec((D, tf), lambda i, f: (0, f)),  # W1 column tile
                pl.BlockSpec((1, tf), lambda i, f: (0, f)),  # b1 tile
                pl.BlockSpec((tf, D), lambda i, f: (f, 0)),  # W2 row tile
                pl.BlockSpec((1, D), lambda i, f: (0, 0)),   # b2 (resident)
            ],
            out_specs=pl.BlockSpec((tm, D), lambda i, f: (i, 0)),
            scratch_shapes=[pltpu.VMEM((tm, D), jnp.float32)],
        )
        kernel = _ffn_kernel_tiled
        semantics = ("parallel", "arbitrary")

    out = pl.pallas_call(
        kernel,
        out_shape=jax.ShapeDtypeStruct((m_pad, D), out_dtype),
        grid_spec=grid_spec,
        cost_estimate=cost,
        compiler_params=pltpu.CompilerParams(
            dimension_semantics=semantics,
            vmem_limit_bytes=budget,
        ),
    )(x2d, w1c, b1c, w2c, b2c)

    return out[:M].reshape(orig_shape)


def _ref_ffn(x, w1, b1, w2, b2):
    return jnp.maximum(x @ w1 + b1, 0.0) @ w2 + b2


if __name__ == "__main__":
    # --- small shapes consistent with the module: (batch, seq, d_model) ---
    B, T, D, DFF = 2, 8, 32, 64
    k1, k2, k3, k4, k5 = jax.random.split(jax.random.PRNGKey(0), 5)
    x = jax.random.normal(k1, (B, T, D), jnp.float32)
    w1 = jax.random.normal(k2, (D, DFF), jnp.float32) * 0.08   # == torch w_1.weight.T
    b1 = jax.random.normal(k3, (DFF,), jnp.float32) * 0.02
    w2 = jax.random.normal(k4, (DFF, D), jnp.float32) * 0.08   # == torch w_2.weight.T
    b2 = jax.random.normal(k5, (D,), jnp.float32) * 0.02

    with jax.default_matmul_precision("highest"):
        ref = jax.block_until_ready(_ref_ffn(x, w1, b1, w2, b2))

    out_bf16 = jax.block_until_ready(positionwise_ffn(x, w1, b1, w2, b2))             # bf16 MXU path
    out_f32 = jax.block_until_ready(positionwise_ffn(x, w1, b1, w2, b2, use_bf16=False))
    assert out_bf16.shape == x.shape
    assert np.all(np.isfinite(np.asarray(out_bf16)))
    np.testing.assert_allclose(np.asarray(out_bf16), np.asarray(ref), rtol=3e-2, atol=3e-2)
    np.testing.assert_allclose(np.asarray(out_f32), np.asarray(ref), rtol=1e-3, atol=1e-3)

    # --- larger case: row padding (M=140 -> 144), 2 row tiles, fully resident weights ---
    B2, T2, D2, DFF2 = 2, 70, 128, 512
    j1, j2, j3, j4, j5 = jax.random.split(jax.random.PRNGKey(1), 5)
    x2 = jax.random.normal(j1, (B2, T2, D2), jnp.float32)
    w1b = jax.random.normal(j2, (D2, DFF2), jnp.float32) * 0.05
    b1b = jax.random.normal(j3, (DFF2,), jnp.float32) * 0.02
    w2b = jax.random.normal(j4, (DFF2, D2), jnp.float32) * 0.05
    b2b = jax.random.normal(j5, (D2,), jnp.float32) * 0.02

    with jax.default_matmul_precision("highest"):
        ref2 = jax.block_until_ready(_ref_ffn(x2, w1b, b1b, w2b, b2b))

    out2 = jax.block_until_ready(positionwise_ffn(x2, w1b, b1b, w2b, b2b))
    np.testing.assert_allclose(np.asarray(out2), np.asarray(ref2), rtol=3e-2, atol=3e-2)

    # --- force the d_ff-reduction (tiled) fallback path to exercise the accumulator kernel ---
    out3 = jax.block_until_ready(positionwise_ffn(x2, w1b, b1b, w2b, b2b, block_f=256))
    np.testing.assert_allclose(np.asarray(out3), np.asarray(ref2), rtol=3e-2, atol=3e-2)

    print("KERNEL_OK")
</pallas_src>

<mosaic_0001>
module attributes {stable_mosaic.version = 11 : i64} {
  func.func @_ffn_kernel_resident(%arg0: i32, %arg1: memref<8x32xbf16, #tpu.memory_space<vmem>>, %arg2: memref<32x64xbf16, #tpu.memory_space<vmem>>, %arg3: memref<1x64xf32, #tpu.memory_space<vmem>>, %arg4: memref<64x32xbf16, #tpu.memory_space<vmem>>, %arg5: memref<1x32xf32, #tpu.memory_space<vmem>>, %arg6: memref<8x32xf32, #tpu.memory_space<vmem>>) attributes {dimension_semantics = [#tpu.dimension_semantics<parallel>], iteration_bounds = array<i64: 2>, scalar_prefetch = 0 : i64, scratch_operands = 0 : i64, tpu.core_type = #tpu.core_type<tc>, window_params = [{transform_indices = @transform_0, window_bounds = array<i64: 8, 32>}, {pipeline_mode = #tpu.pipeline_mode<synchronous>, transform_indices = @transform_1, window_bounds = array<i64: 32, 64>}, {pipeline_mode = #tpu.pipeline_mode<synchronous>, transform_indices = @transform_2, window_bounds = array<i64: 1, 64>}, {pipeline_mode = #tpu.pipeline_mode<synchronous>, transform_indices = @transform_3, window_bounds = array<i64: 64, 32>}, {pipeline_mode = #tpu.pipeline_mode<synchronous>, transform_indices = @transform_4, window_bounds = array<i64: 1, 32>}, {transform_indices = @transform_5, window_bounds = array<i64: 8, 32>}]} {
    %c0 = arith.constant 0 : index
    %c0_0 = arith.constant 0 : index
    %0 = vector.load %arg1[%c0, %c0_0] : memref<8x32xbf16, #tpu.memory_space<vmem>>, vector<8x32xbf16>
    %c0_1 = arith.constant 0 : index
    %c0_2 = arith.constant 0 : index
    %1 = vector.load %arg2[%c0_1, %c0_2] : memref<32x64xbf16, #tpu.memory_space<vmem>>, vector<32x64xbf16>
    %cst = arith.constant dense<0.000000e+00> : vector<8x64xf32>
    %2 = tpu.matmul %0, %1, %cst {dimension_numbers = #tpu.dot_dimension_numbers<[1], [0], [0], [1], [0, 0, 1, 1], [], []>} : vector<8x32xbf16>, vector<32x64xbf16>, vector<8x64xf32> -> vector<8x64xf32>
    %c0_3 = arith.constant 0 : index
    %c0_4 = arith.constant 0 : index
    %3 = vector.load %arg3[%c0_3, %c0_4] : memref<1x64xf32, #tpu.memory_space<vmem>>, vector<1x64xf32>
    %4 = vector.broadcast %3 : vector<1x64xf32> to vector<8x64xf32>
    %5 = arith.addf %2, %4 : vector<8x64xf32>
    %cst_5 = arith.constant 0.000000e+00 : f32
    %6 = vector.broadcast %cst_5 : f32 to vector<8x64xf32>
    %7 = arith.maximumf %5, %6 : vector<8x64xf32>
    %8 = arith.truncf %7 : vector<8x64xf32> to vector<8x64xbf16>
    %c0_6 = arith.constant 0 : index
    %c0_7 = arith.constant 0 : index
    %9 = vector.load %arg4[%c0_6, %c0_7] : memref<64x32xbf16, #tpu.memory_space<vmem>>, vector<64x32xbf16>
    %cst_8 = arith.constant dense<0.000000e+00> : vector<8x32xf32>
    %10 = tpu.matmul %8, %9, %cst_8 {dimension_numbers = #tpu.dot_dimension_numbers<[1], [0], [0], [1], [0, 0, 1, 1], [], []>} : vector<8x64xbf16>, vector<64x32xbf16>, vector<8x32xf32> -> vector<8x32xf32>
    %c0_9 = arith.constant 0 : index
    %c0_10 = arith.constant 0 : index
    %11 = vector.load %arg5[%c0_9, %c0_10] : memref<1x32xf32, #tpu.memory_space<vmem>>, vector<1x32xf32>
    %12 = vector.broadcast %11 : vector<1x32xf32> to vector<8x32xf32>
    %13 = arith.addf %10, %12 : vector<8x32xf32>
    %c0_11 = arith.constant 0 : index
    %c0_12 = arith.constant 0 : index
    %14 = vector.load %arg6[%c0_11, %c0_12] : memref<8x32xf32, #tpu.memory_space<vmem>>, vector<8x32xf32>
    tpu.vector_store %arg6[%c0_11, %c0_12], %13 {strides = array<i32>} : memref<8x32xf32, #tpu.memory_space<vmem>>, vector<8x32xf32>,
    return
  }
  func.func @transform_0(%arg0: i32) -> (i32, i32) {
    %c0_i32 = arith.constant 0 : i32
    %c0_i32_0 = arith.constant 0 : i32
    return %arg0, %c0_i32 : i32, i32
  }
  func.func @transform_1(%arg0: i32) -> (i32, i32) {
    %c0_i32 = arith.constant 0 : i32
    %c0_i32_0 = arith.constant 0 : i32
    %c0_i32_1 = arith.constant 0 : i32
    return %c0_i32, %c0_i32_0 : i32, i32
  }
  func.func @transform_2(%arg0: i32) -> (i32, i32) {
    %c0_i32 = arith.constant 0 : i32
    %c0_i32_0 = arith.constant 0 : i32
    %c0_i32_1 = arith.constant 0 : i32
    return %c0_i32, %c0_i32_0 : i32, i32
  }
  func.func @transform_3(%arg0: i32) -> (i32, i32) {
    %c0_i32 = arith.constant 0 : i32
    %c0_i32_0 = arith.constant 0 : i32
    %c0_i32_1 = arith.constant 0 : i32
    return %c0_i32, %c0_i32_0 : i32, i32
  }
  func.func @transform_4(%arg0: i32) -> (i32, i32) {
    %c0_i32 = arith.constant 0 : i32
    %c0_i32_0 = arith.constant 0 : i32
    %c0_i32_1 = arith.constant 0 : i32
    return %c0_i32, %c0_i32_0 : i32, i32
  }
  func.func @transform_5(%arg0: i32) -> (i32, i32) {
    %c0_i32 = arith.constant 0 : i32
    %c0_i32_0 = arith.constant 0 : i32
    return %arg0, %c0_i32 : i32, i32
  }
}

</mosaic_0001>

<llo_original>
// kernel: tpu_custom_call.1
$region0: #{tpu_custom_call.1}
  #allocation0 [shape = 'u32[]', space=smem, size = 0x4, offset = 0x4, fixed_abs, tag = 'smem constant byte address 0x4 - core index']
  #allocation1 [shape = 'u32[144,128]{1,0:T(1,128)}', space=vmem, size = 0x12000, scoped, tag = 'internal scratch']
  %s0 = inlined_call_operand.vmem [shape: bf16[16,32], index: 0, kind: input, shape index: {}]
  %s1 = inlined_call_operand.vmem [shape: bf16[32,64], index: 1, kind: input, shape index: {}]
  %s2 = inlined_call_operand.vmem [shape: f32[1,64], index: 2, kind: input, shape index: {}]
  %s3 = inlined_call_operand.vmem [shape: bf16[64,32], index: 3, kind: input, shape index: {}]
  %s4 = inlined_call_operand.vmem [shape: f32[1,32], index: 4, kind: input, shape index: {}]
  %s5 = inlined_call_operand.hbm [shape: f32[16,32], index: 5, kind: output, shape index: {}]
  %s6 = sld [smem:[#allocation0]]
  $region53: #{tpu_custom_call.1} parent=0
    _
  %s8 = ssub.s32 1, %s6
  %s9 = scalar_select 0, %s8, %s6
  $region1: #{tpu_custom_call.1} parent=0
    #allocation2 [shape = 'u8[8192]{0}', space=vmem, size = 0x2000, scoped, tag = 'output window, operand 0']
    #allocation3 [shape = 's32[2]{0}', space=sflag, size = 0x8, scoped, tag = 'scoped memory for tpu_custom_call.1']
    %10 = vsyncpa [#allocation3], 0
    %s11 = scalar_lea.sflag [#allocation3], 1
    %12 = vsyncpa %s11, 0
    loop: start=0, step=1, limit=4
    $region2: #{tpu_custom_call.1} parent=1 // loop_pre_header
      _
    $region3: #{tpu_custom_call.1} parent=1 // loop_header
      %s14 = sphi 0, %s18
      %p15 = scmp.ge.s32.totalorder %s14, 4
      %s24 = sphi 0, %s26
      %s27 = sphi 0, %s24
      %s28 = sphi 0, %s27
      %s44 = sphi 0, %s28
      %s48 = sphi 0, %s48
      %s50 = sphi 0, %s48
      %s51 = sphi 0, %s50
      %s65 = sphi 0, %s51
      %s69 = sphi 0, %s69
      %s71 = sphi 0, %s69
      %s72 = sphi 0, %s71
      %s86 = sphi 0, %s72
      %s90 = sphi 0, %s90
      %s92 = sphi 0, %s90
      %s93 = sphi 0, %s92
      %s107 = sphi 0, %s93
      %s111 = sphi 0, %s111
      %s113 = sphi 0, %s111
      %s114 = sphi 0, %s113
      %s128 = sphi 0, %s114
      %s134 = sphi 0, %s136
      %s137 = sphi 0, %s134
      %s138 = sphi 0, %s137
      %s154 = sphi 0, %s138
    $region4: #{tpu_custom_call.1} parent=1 // loop_header_branch
      %17 = sbr.rel (%p15) target = $region8
    $region5: #{tpu_custom_call.1} parent=1 // loop_body
      %s19 = ssub.s32 %s14, 1
      %s20 = ssub.s32 %s14, 2
      %s21 = sadd.s32 %s14, 1
      %s22 = ssub.s32 %s14, %s21
      %p23 = scmp.eq.s32.totalorder %s22, 0
      %s25 = sadd.s32 %s24, 1
      %s26 = scalar_select %p23, %s24, %s25
      %p29 = pneg %p23
      %p30 = scmp.eq.s32.totalorder %s14, 1
      %p31 = por %p29, %p30
      %p32 = scmp.ne.s32.totalorder %s24, %s27
      %p33 = scmp.eq.s32.totalorder %s14, 0
      %p34 = por %p32, %p33
      %p35 = scmp.ne.s32.totalorder %s24, %s27
      %p36 = scmp.eq.s32.totalorder %s19, 1
      %p37 = por %p35, %p36
      %p38 = scmp.ne.s32.totalorder %s27, %s28
      %p39 = scmp.eq.s32.totalorder %s19, 0
      %p40 = por %p38, %p39
      %p41 = scmp.ne.s32.totalorder %s27, %s28
      %p42 = scmp.eq.s32.totalorder %s20, 1
      %p43 = por %p41, %p42
      %p45 = scmp.ne.s32.totalorder %s28, %s44
      %p46 = scmp.eq.s32.totalorder %s20, 0
      %p47 = por %p45, %p46
      %s49 = sadd.s32 %s48, 1
      %p52 = scmp.eq.s32.totalorder %s14, 1
      %p53 = scmp.ne.s32.totalorder %s48, %s50
      %p54 = scmp.eq.s32.totalorder %s14, 0
      %p55 = por %p53, %p54
      %p56 = scmp.ne.s32.totalorder %s48, %s50
      %p57 = scmp.eq.s32.totalorder %s19, 1
      %p58 = por %p56, %p57
      %p59 = scmp.ne.s32.totalorder %s50, %s51
      %p60 = scmp.eq.s32.totalorder %s19, 0
      %p61 = por %p59, %p60
      %p62 = scmp.ne.s32.totalorder %s50, %s51
      %p63 = scmp.eq.s32.totalorder %s20, 1
      %p64 = por %p62, %p63
      %p66 = scmp.ne.s32.totalorder %s51, %s65
      %p67 = scmp.eq.s32.totalorder %s20, 0
      %p68 = por %p66, %p67
      %s70 = sadd.s32 %s69, 1
      %p73 = scmp.eq.s32.totalorder %s14, 1
      %p74 = scmp.ne.s32.totalorder %s69, %s71
      %p75 = scmp.eq.s32.totalorder %s14, 0
      %p76 = por %p74, %p75
      %p77 = scmp.ne.s32.totalorder %s69, %s71
      %p78 = scmp.eq.s32.totalorder %s19, 1
      %p79 = por %p77, %p78
      %p80 = scmp.ne.s32.totalorder %s71, %s72
      %p81 = scmp.eq.s32.totalorder %s19, 0
      %p82 = por %p80, %p81
      %p83 = scmp.ne.s32.totalorder %s71, %s72
      %p84 = scmp.eq.s32.totalorder %s20, 1
      %p85 = por %p83, %p84
      %p87 = scmp.ne.s32.totalorder %s72, %s86
      %p88 = scmp.eq.s32.totalorder %s20, 0
      %p89 = por %p87, %p88
      %s91 = sadd.s32 %s90, 1
      %p94 = scmp.eq.s32.totalorder %s14, 1
      %p95 = scmp.ne.s32.totalorder %s90, %s92
      %p96 = scmp.eq.s32.totalorder %s14, 0
      %p97 = por %p95, %p96
      %p98 = scmp.ne.s32.totalorder %s90, %s92
      %p99 = scmp.eq.s32.totalorder %s19, 1
      %p100 = por %p98, %p99
      %p101 = scmp.ne.s32.totalorder %s92, %s93
      %p102 = scmp.eq.s32.totalorder %s19, 0
      %p103 = por %p101, %p102
      %p104 = scmp.ne.s32.totalorder %s92, %s93
      %p105 = scmp.eq.s32.totalorder %s20, 1
      %p106 = por %p104, %p105
      %p108 = scmp.ne.s32.totalorder %s93, %s107
      %p109 = scmp.eq.s32.totalorder %s20, 0
      %p110 = por %p108, %p109
      %s112 = sadd.s32 %s111, 1
      %p115 = scmp.eq.s32.totalorder %s14, 1
      %p116 = scmp.ne.s32.totalorder %s111, %s113
      %p117 = scmp.eq.s32.totalorder %s14, 0
      %p118 = por %p116, %p117
      %p119 = scmp.ne.s32.totalorder %s111, %s113
      %p120 = scmp.eq.s32.totalorder %s19, 1
      %p121 = por %p119, %p120
      %p122 = scmp.ne.s32.totalorder %s113, %s114
      %p123 = scmp.eq.s32.totalorder %s19, 0
      %p124 = por %p122, %p123
      %p125 = scmp.ne.s32.totalorder %s113, %s114
      %p126 = scmp.eq.s32.totalorder %s20, 1
      %p127 = por %p125, %p126
      %p129 = scmp.ne.s32.totalorder %s114, %s128
      %p130 = scmp.eq.s32.totalorder %s20, 0
      %p131 = por %p129, %p130
      %s132 = ssub.s32 %s14, %s21
      %p133 = scmp.eq.s32.totalorder %s132, 0
      %s135 = sadd.s32 %s134, 1
      %s136 = scalar_select %p133, %s134, %s135
      %p139 = pneg %p133
      %p140 = scmp.eq.s32.totalorder %s14, 1
      %p141 = por %p139, %p140
      %p142 = scmp.ne.s32.totalorder %s134, %s137
      %p143 = scmp.eq.s32.totalorder %s14, 0
      %p144 = por %p142, %p143
      %p145 = scmp.ne.s32.totalorder %s134, %s137
      %p146 = scmp.eq.s32.totalorder %s19, 1
      %p147 = por %p145, %p146
      %p148 = scmp.ne.s32.totalorder %s137, %s138
      %p149 = scmp.eq.s32.totalorder %s19, 0
      %p150 = por %p148, %p149
      %p151 = scmp.ne.s32.totalorder %s137, %s138
      %p152 = scmp.eq.s32.totalorder %s20, 1
      %p153 = por %p151, %p152
      %p155 = scmp.ne.s32.totalorder %s138, %s154
      %p156 = scmp.eq.s32.totalorder %s20, 0
      %p157 = por %p155, %p156
      %p158 = scmp.le.s32.totalorder 1, %s14
      %p159 = scmp.lt.s32.totalorder %s14, 3
      %p160 = pnand %p158, %p159
      %p161 = pneg %p160
      // Predicated region
      $region9: #{tpu_custom_call.1} parent=5 // pred_check
        _
      $region10: #{tpu_custom_call.1} parent=5 // pred_check_branch
        %163 = sbr.rel (%p160) target = $region12
      $region11: #{tpu_custom_call.1} parent=5 // pred_region
        %s164 = ssub.s32 %s14, 1
        // Predicated region
        $region13: #{tpu_custom_call.1} parent=11 // pred_check
          %p165 = pneg %p61
        $region14: #{tpu_custom_call.1} parent=11 // pred_check_branch
          %167 = sbr.rel (%p165) target = $region16
        $region15: #{tpu_custom_call.1} parent=11 // pred_region
          _
        $region16: #{tpu_custom_call.1} parent=11 // pred_fallthru
          _
        // Predicated region
        $region17: #{tpu_custom_call.1} parent=11 // pred_check
          %p168 = pneg %p82
        $region18: #{tpu_custom_call.1} parent=11 // pred_check_branch
          %170 = sbr.rel (%p168) target = $region20
        $region19: #{tpu_custom_call.1} parent=11 // pred_region
          _
        $region20: #{tpu_custom_call.1} parent=11 // pred_fallthru
          _
        // Predicated region
        $region21: #{tpu_custom_call.1} parent=11 // pred_check
          %p171 = pneg %p103
        $region22: #{tpu_custom_call.1} parent=11 // pred_check_branch
          %173 = sbr.rel (%p171) target = $region24
        $region23: #{tpu_custom_call.1} parent=11 // pred_region
          _
        $region24: #{tpu_custom_call.1} parent=11 // pred_fallthru
          _
        // Predicated region
        $region25: #{tpu_custom_call.1} parent=11 // pred_check
          %p174 = pneg %p124
        $region26: #{tpu_custom_call.1} parent=11 // pred_check_branch
          %176 = sbr.rel (%p174) target = $region28
        $region27: #{tpu_custom_call.1} parent=11 // pred_region
          _
        $region28: #{tpu_custom_call.1} parent=11 // pred_fallthru
          _
      $region12: #{tpu_custom_call.1} parent=5 // pred_fallthru
        _
      %p177 = scmp.lt.s32.totalorder %s14, 2
      // Predicated region
      $region29: #{tpu_custom_call.1} parent=5 // pred_check
        %p178 = pneg %p177
      $region30: #{tpu_custom_call.1} parent=5 // pred_check_branch
        %180 = sbr.rel (%p178) target = $region32
      $region31: #{tpu_custom_call.1} parent=5 // pred_region
        // Predicated region
        $region33: #{tpu_custom_call.1} parent=31 // pred_check
          %p181 = pneg %p34
        $region34: #{tpu_custom_call.1} parent=31 // pred_check_branch
          %183 = sbr.rel (%p181) target = $region36
        $region35: #{tpu_custom_call.1} parent=31 // pred_region
          %p184 = scmp.lt.s32.totalorder %s14, 1
          %s185 = scalar_select %p184, %s14, 1
          %s186 = smul.addr %s185, 4
          %s187 = scalar_lea.vmem %s0, %s186
        $region36: #{tpu_custom_call.1} parent=31 // pred_fallthru
          _
      $region32: #{tpu_custom_call.1} parent=5 // pred_fallthru
        _
      %p188 = scmp.le.s32.totalorder 1, %s14
      %p189 = scmp.lt.s32.totalorder %s14, 3
      %p190 = pnand %p188, %p189
      %p191 = pneg %p190
      // Predicated region
      $region37: #{tpu_custom_call.1} parent=5 // pred_check
        _
      $region38: #{tpu_custom_call.1} parent=5 // pred_check_branch
        %193 = sbr.rel (%p190) target = $region40
      $region39: #{tpu_custom_call.1} parent=5 // pred_region
        %s194 = ssub.s32 %s14, 1
        %p195 = scmp.lt.s32.totalorder %s19, 1
        %s196 = scalar_select %p195, %s19, 1
        %s197 = smul.addr %s196, 4
        %s198 = scalar_lea.vmem %s0, %s197
        %p199 = pneg %p40
        %p200 = pneg %p37
        %p201 = pneg %p61
        %p202 = pneg %p58
        %p203 = pneg %p82
        %p204 = pneg %p79
        %p205 = pneg %p103
        %p206 = pneg %p100
        %p207 = pneg %p124
        %p208 = pneg %p121
        %p209 = pneg %p150
        %p210 = pneg %p147
        %s211 = sand.u32 %s137, 1
        %s212 = scalar_lea.sflag [#allocation3], %s211
        %s213 = sand.u32 %s137, 1
        %s214 = smul.addr %s213, 8
        %s215 = scalar_lea.vmem [#allocation2], %s214
        %p216 = scmp.lt.s32.totalorder %s19, 1
        %s217 = scalar_select %p216, %s19, 1
        %s218 = smul.addr %s217, 4
        %s219 = scalar_lea.vmem %s0, %s218
        %v221 = vld [vmem:[%s219] sm:$0xf]
        %v222 = vld [vmem:[%s1] sm:$0xf]
        %v223 = vld [vmem:[%s1 + $0x4] sm:$0xf]
        %v224 = vld [vmem:[%s1 + $0x8] sm:$0xf]
        %v225 = vld [vmem:[%s1 + $0xc] sm:$0xf]
        %v226 = vld [vmem:[%s2] sm:$0x1]
        %v228 = vlaneseq
        %v229 = vshrl.u32 %v228, 7
        %v230 = vsub.s32 0, %v229
        %v231 = vrot.slane %v226, %v230
        %v237 = vunpack.c.l.b16 %v222
        %v238 = vunpack.c.l.b16 %v223
        %v239 = vunpack.c.l.b16 %v224
        %v240 = vunpack.c.l.b16 %v225
        %v241 = vpack.c.b16 %v238, %v237
        %v242 = vpack.c.b16 %v240, %v239
        %vm245 = vcmask 261120
        %v247 = vsel %vm245, %v221, 0
        %249 = vmatprep.subr.bf16.mxu0 0
        %250 = vmatpush1.bf16.msra.mxu0 0
        %251 = vmatprep.subr.bf16.mxu0 0
        %252 = vmatpush1.bf16.msra.mxu0 0
        %253 = vmatprep.subr.bf16.mxu0 0
        %254 = vmatpush1.bf16.msra.mxu0 0
        %255 = vmatprep.subr.bf16.mxu0 0
        %256 = vmatpush1.bf16.msra.mxu0 0
        %257 = vmatprep.subr.bf16.mxu0 0
        %258 = vmatpush1.bf16.msra.mxu0 0
        %259 = vmatprep.subr.bf16.mxu0 0
        %260 = vmatpush1.bf16.msra.mxu0 0
        %261 = vmatprep.subr.bf16.mxu0 0
        %262 = vmatpush1.bf16.msra.mxu0 %v242
        %263 = vmatprep.subr.bf16.mxu0 0
        %264 = vmatpush1.bf16.msra.mxu0 %v241
        %265 = vmatprep.subr.bf16.mxu0 0
        %266 = vmatpush2.bf16.msra.mxu0 0
        %267 = vmatprep.subr.bf16.mxu0 0
        %268 = vmatpush2.bf16.msra.mxu0 0
        %269 = vmatprep.subr.bf16.mxu0 0
        %270 = vmatpush2.bf16.msra.mxu0 0
        %271 = vmatprep.subr.bf16.mxu0 0
        %272 = vmatpush2.bf16.msra.mxu0 0
        %273 = vmatprep.subr.bf16.mxu0 0
        %274 = vmatpush2.bf16.msra.mxu0 0
        %275 = vmatprep.subr.bf16.mxu0 0
        %276 = vmatpush2.bf16.msra.mxu0 0
        %277 = vmatprep.subr.bf16.mxu0 0
        %278 = vmatpush2.bf16.msra.mxu0 0
        %279 = vmatprep.subr.bf16.mxu0 0
        %280 = vmatpush2.bf16.msra.mxu0 0
        %281 = vmatprep.mubr.bf16.mxu0 0
        %282 = vmatmul.mubr.bf16.gmra.mxu0 %v247
        %v283 = vpop.f32.mrf.mxu0
        %v284 = vadd.f32 %v231, %v283
        %v285 = vpop.f32.mrf.mxu0
        %v286 = vpop.f32.mrf.mxu0
        %v287 = vpop.f32.mrf.mxu0
        %288 = vdwg.mxu0
        %v289 = vmax.f32 %v284, 0.0
        %v290 = vpack.c.bf16 %v289, %v289
        %v291 = vld [vmem:[%s3] sm:$0xf]
        %v292 = vld [vmem:[%s3 + $0x4] sm:$0xf]
        %v293 = vld [vmem:[%s3 + $0x8] sm:$0xf]
        %v294 = vld [vmem:[%s3 + $0xc] sm:$0xf]
        %v295 = vld [vmem:[%s3 + $0x10] sm:$0xf]
        %v296 = vld [vmem:[%s3 + $0x14] sm:$0xf]
        %v297 = vld [vmem:[%s3 + $0x18] sm:$0xf]
        %v298 = vld [vmem:[%s3 + $0x1c] sm:$0xf]
        %v299 = vld [vmem:[%s4] sm:$0x1]
        %v301 = vlaneseq
        %v302 = vshrl.u32 %v301, 7
        %v303 = vsub.s32 0, %v302
        %v304 = vrot.slane %v299, %v303
        %v314 = vunpack.c.l.b16 %v291
        %v315 = vunpack.c.l.b16 %v292
        %v316 = vunpack.c.l.b16 %v293
        %v317 = vunpack.c.l.b16 %v294
        %v318 = vunpack.c.l.b16 %v295
        %v319 = vunpack.c.l.b16 %v296
        %v320 = vunpack.c.l.b16 %v297
        %v321 = vunpack.c.l.b16 %v298
        %v322 = vpack.c.b16 %v315, %v314
        %v323 = vpack.c.b16 %v317, %v316
        %v324 = vpack.c.b16 %v319, %v318
        %v325 = vpack.c.b16 %v321, %v320
        %vm330 = vcmask 523264
        %v332 = vsel %vm330, %v290, 0
        %334 = vmatprep.subr.bf16.mxu0 0
        %335 = vmatpush1.bf16.msra.mxu0 0
        %336 = vmatprep.subr.bf16.mxu0 0
        %337 = vmatpush1.bf16.msra.mxu0 0
        %338 = vmatprep.subr.bf16.mxu0 0
        %339 = vmatpush1.bf16.msra.mxu0 0
        %340 = vmatprep.subr.bf16.mxu0 0
        %341 = vmatpush1.bf16.msra.mxu0 0
        %342 = vmatprep.subr.bf16.mxu0 0
        %343 = vmatpush1.bf16.msra.mxu0 %v325
        %344 = vmatprep.subr.bf16.mxu0 0
        %345 = vmatpush1.bf16.msra.mxu0 %v324
        %346 = vmatprep.subr.bf16.mxu0 0
        %347 = vmatpush1.bf16.msra.mxu0 %v323
        %348 = vmatprep.subr.bf16.mxu0 0
        %349 = vmatpush1.bf16.msra.mxu0 %v322
        %350 = vmatprep.subr.bf16.mxu0 0
        %351 = vmatpush2.bf16.msra.mxu0 0
        %352 = vmatprep.subr.bf16.mxu0 0
        %353 = vmatpush2.bf16.msra.mxu0 0
        %354 = vmatprep.subr.bf16.mxu0 0
        %355 = vmatpush2.bf16.msra.mxu0 0
        %356 = vmatprep.subr.bf16.mxu0 0
        %357 = vmatpush2.bf16.msra.mxu0 0
        %358 = vmatprep.subr.bf16.mxu0 0
        %359 = vmatpush2.bf16.msra.mxu0 0
        %360 = vmatprep.subr.bf16.mxu0 0
        %361 = vmatpush2.bf16.msra.mxu0 0
        %362 = vmatprep.subr.bf16.mxu0 0
        %363 = vmatpush2.bf16.msra.mxu0 0
        %364 = vmatprep.subr.bf16.mxu0 0
        %365 = vmatpush2.bf16.msra.mxu0 0
        %366 = vmatprep.mubr.bf16.mxu0 0
        %367 = vmatmul.mubr.bf16.gmra.mxu0 %v332
        %v368 = vpop.f32.mrf.mxu0
        %v369 = vadd.f32 %v304, %v368
        %v370 = vpop.f32.mrf.mxu0
        %v371 = vpop.f32.mrf.mxu0
        %v372 = vpop.f32.mrf.mxu0
        %373 = vdwg.mxu0
        %374 = vst.msk [vmem:[%s215] sm:$0xff] %vm245, %v369
        %s375 = sand.u32 %s137, 1
        %s376 = scalar_lea.sflag [#allocation3], %s375
        %s377 = sand.u32 %s137, 1
        %s378 = smul.addr %s377, 8
        %s379 = scalar_lea.vmem [#allocation2], %s378
        // Predicated region
        $region41: #{tpu_custom_call.1} parent=39 // pred_check
          %p380 = pneg %p147
        $region42: #{tpu_custom_call.1} parent=39 // pred_check_branch
          %382 = sbr.rel (%p380) target = $region44
        $region43: #{tpu_custom_call.1} parent=39 // pred_region
          %s384 = ssub.s32 128, 128
          %385 = vsyncadd %s376, %s384
          %s386 = smul.addr %s19, 128
          %s387 = scalar_lea.hbm %s5, %s386
          %s389 = sshll.u32 %s379, 4
          %s390 = int_to_ptr.vmem [resolvable:$true] %s389
          %392 = dma.vmem_to_hbm [thread:$0]  %s390, 128, %s387, %s376
        $region44: #{tpu_custom_call.1} parent=39 // pred_fallthru
          _
      $region40: #{tpu_custom_call.1} parent=5 // pred_fallthru
        _
      %p393 = scmp.le.s32.totalorder 2, %s14
      // Predicated region
      $region45: #{tpu_custom_call.1} parent=5 // pred_check
        %p394 = pneg %p393
      $region46: #{tpu_custom_call.1} parent=5 // pred_check_branch
        %396 = sbr.rel (%p394) target = $region48
      $region47: #{tpu_custom_call.1} parent=5 // pred_region
        %s397 = ssub.s32 %s14, 2
        // Predicated region
        $region49: #{tpu_custom_call.1} parent=47 // pred_check
          %p398 = pneg %p153
        $region50: #{tpu_custom_call.1} parent=47 // pred_check_branch
          %400 = sbr.rel (%p398) target = $region52
        $region51: #{tpu_custom_call.1} parent=47 // pred_region
          %s401 = sand.u32 %s138, 1
          %s402 = scalar_lea.sflag [#allocation3], %s401
          %s403 = sand.u32 %s138, 1
          %s404 = smul.addr %s403, 8
          %s405 = scalar_lea.vmem [#allocation2], %s404
          %406 = dma.done %s402, 128
        $region52: #{tpu_custom_call.1} parent=47 // pred_fallthru
          _
      $region48: #{tpu_custom_call.1} parent=5 // pred_fallthru
        _
    $region6: #{tpu_custom_call.1} parent=1 // loop_footer
      %s18 = sadd.s32 1, %s14
    $region7: #{tpu_custom_call.1} parent=1 // loop_footer_branch
      %13 = sbr.rel target = $region3
    $region8: #{tpu_custom_call.1} parent=1 // loop_exit
      _
    %407 = vsyncpa [#allocation3], 1
    %s408 = scalar_lea.sflag [#allocation3], 1
    %409 = vsyncpa %s408, 1

</llo_original>
